<compile_context>
chip_gen: v7x
topology: tpu7x:2x2x1
jax: 0.10.0
libtpu: 0.0.40
codegen_flags: <defaults>
</compile_context>

<pallas_src>
import jax
import jax.numpy as jnp
from jax.experimental import pallas as pl
from jax.experimental.pallas import tpu as pltpu


def _cdiv(a, b):
    return -(-a // b)


def _round_up(x, m):
    return ((x + m - 1) // m) * m


def _tpu_vmem_and_multicore():
    """(per-TC VMEM bytes, is_multicore_chip) with a conservative fallback."""
    vmem = None
    try:
        info = pltpu.get_tpu_info()
        for name in ("vmem_capacity_bytes", "vmem_size_bytes", "vmem_bytes"):
            v = getattr(info, name, None)
            if v:
                vmem = int(v)
                break
    except Exception:
        vmem = None
    if not vmem:
        vmem = 64 << 20                          # conservative: assume v7x-class
    # 64 MiB per-TC VMEM -> v7x-class chip (2 TensorCores); 128 MiB -> v5e/v6e.
    multicore = vmem <= (64 << 20) + (1 << 20)
    return vmem, multicore


def _mix_in_regs(w_ref, layers_ref):
    """sum_i w[i] * layers[i], accumulated in vregs (f32). No VMEM scratch."""
    nl = layers_ref.shape[0]
    acc = layers_ref[0].astype(jnp.float32) * w_ref[0]
    for i in range(1, nl):                       # NL is small (13) -> unrolled
        acc = acc + layers_ref[i].astype(jnp.float32) * w_ref[i]
    return acc


def _mix_kernel(w_ref, layers_ref, o_ref):
    o_ref[...] = _mix_in_regs(w_ref, layers_ref).astype(o_ref.dtype)


def _make_mix_proj_kernel(compute_dtype):
    f32 = jnp.dtype(jnp.float32)
    compute_dtype = jnp.dtype(compute_dtype)

    def kernel(w_ref, layers_ref, wp_ref, b_ref, o_ref):
        acc = _mix_in_regs(w_ref, layers_ref)
        if compute_dtype == f32:
            # Faithful emulation of the f32 nn.Linear (multi-pass f32 matmul).
            out = jax.lax.dot(acc, wp_ref[...],
                              precision=jax.lax.Precision.HIGHEST,
                              preferred_element_type=jnp.float32)
        else:
            # One-pass bf16 MXU matmul with f32 accumulation (documented
            # precision tradeoff vs. the PyTorch f32 Linear).
            out = jnp.dot(acc.astype(compute_dtype), wp_ref[...],
                          preferred_element_type=jnp.float32)
        o_ref[...] = (out + b_ref[...]).astype(o_ref.dtype)

    return kernel


def encoder_forward(encoded_layers, weighing_params, proj_wt=None, proj_b=None,
                    tile_m=None, proj_compute_dtype=jnp.bfloat16):
    """Encoder.forward (just_last_layer=False) on pre-computed hidden states.

    encoded_layers: (NL, N, H) stack of per-layer hidden states.
    proj_wt: (H, P) == nn.Linear.weight.T;  proj_b: (P,).
    """
    # TODO(synk): just_last_layer=True branch is a trivial slice of
    # encoded_layers[-1]; only the default weighted-average path is kernelized.
    NL, N, H = encoded_layers.shape
    in_dtype = encoded_layers.dtype
    itemsize = jnp.dtype(in_dtype).itemsize
    out_dtype = in_dtype

    vmem_cap, multicore = _tpu_vmem_and_multicore()

    # Layer softmax (13 elements) computed once here; passed to the kernel as
    # SMEM scalars via scalar prefetch.
    soft_w = jax.nn.softmax(weighing_params.astype(jnp.float32))

    # --- tile selection ------------------------------------------------------
    if tile_m is None:
        # Double-buffered layer input (2*NL*tile_m*H*itemsize) dominates VMEM.
        #   v7x (64 MiB/TC): keep it <= 24 MiB, rows capped at 512.
        #   v5e/v6e (128 MiB): <= 44 MiB, rows capped at 1024 (HBM-bound, so
        #   bigger tiles just amortize the ~0.35 us/step overhead).
        vmem_budget = (24 << 20) if multicore else (44 << 20)
        tile_cap = 512 if multicore else 1024
        per_row = 2 * NL * H * itemsize
        tile_m = max(16, min(tile_cap, (vmem_budget // per_row) // 16 * 16))
        tile_m = min(tile_m, _round_up(N, 16))    # don't pad tiny N to a huge tile
        if multicore and N > 16:
            # v7x: two TensorCores share the "parallel" grid axis -> aim for an
            # even number of blocks when the grid is small.
            nb = _cdiv(N, tile_m)
            if nb % 2 == 1 and nb < 8:
                tile_m = max(16, _round_up(_cdiv(N, nb + 1), 16))
    tile_m = max(16, _round_up(tile_m, 16))

    n_blocks = _cdiv(N, tile_m)
    N_pad = n_blocks * tile_m
    if N_pad != N:
        # NOTE: padded rows are zero; in the proj path they come out as `bias`,
        # which is harmless because the wrapper slices them off below.
        encoded_layers = jnp.pad(encoded_layers, ((0, 0), (0, N_pad - N), (0, 0)))
    grid = (n_blocks,)

    def _compiler_params(needed_bytes):
        # Leave ~8 MiB below physical VMEM for Mosaic internal scratch/semaphores.
        hard_cap = max(vmem_cap - (8 << 20), 32 << 20)
        limit = int(min(max(needed_bytes + (4 << 20), 32 << 20), hard_cap))
        return pltpu.CompilerParams(dimension_semantics=("parallel",),
                                    vmem_limit_bytes=limit)

    layer_spec = pl.BlockSpec((NL, tile_m, H), lambda i, sw: (0, i, 0))

    if proj_wt is None:
        needed = (2 * NL * tile_m * H * itemsize             # dbl-buffered input
                  + 2 * tile_m * H * jnp.dtype(out_dtype).itemsize
                  + 2 * tile_m * H * 4)                      # f32 mix temporaries
        out = pl.pallas_call(
            _mix_kernel,
            out_shape=jax.ShapeDtypeStruct((N_pad, H), out_dtype),
            grid_spec=pltpu.PrefetchScalarGridSpec(
                num_scalar_prefetch=1, grid=grid,
                in_specs=[layer_spec],
                out_specs=pl.BlockSpec((tile_m, H), lambda i, sw: (i, 0))),
            compiler_params=_compiler_params(needed),
        )(soft_w, encoded_layers)
        return out[:N]

    assert proj_b is not None
    H_w, P = proj_wt.shape
    assert H_w == H
    compute_dtype = jnp.dtype(proj_compute_dtype)
    w_itemsize = compute_dtype.itemsize

    # Pad the projection dim to a multiple of 128 -> lane-dense output stores.
    P_pad = _round_up(P, 128)
    proj_wt = proj_wt.astype(compute_dtype)
    proj_b = proj_b.astype(jnp.float32).reshape(1, P)
    if P_pad != P:
        proj_wt = jnp.pad(proj_wt, ((0, 0), (0, P_pad - P)))
        proj_b = jnp.pad(proj_b, ((0, 0), (0, P_pad - P)))

    # TODO(synk): mark the grid-invariant W/b specs pipeline_mode=pl.Buffered(1)
    # once single-buffered pipeline_mode is guaranteed on the target jax version.
    needed = (2 * NL * tile_m * H * itemsize                 # dbl-buffered input
              + 2 * tile_m * P_pad * jnp.dtype(out_dtype).itemsize
              + 2 * (H * P_pad * w_itemsize + P_pad * 4)     # proj W + bias
              + 2 * tile_m * H * 4                           # f32 mix temporaries
              + tile_m * P_pad * 4)                          # f32 matmul result
    out = pl.pallas_call(
        _make_mix_proj_kernel(compute_dtype),
        out_shape=jax.ShapeDtypeStruct((N_pad, P_pad), out_dtype),
        grid_spec=pltpu.PrefetchScalarGridSpec(
            num_scalar_prefetch=1, grid=grid,
            in_specs=[layer_spec,
                      pl.BlockSpec((H, P_pad), lambda i, sw: (0, 0)),
                      pl.BlockSpec((1, P_pad), lambda i, sw: (0, 0))],
            out_specs=pl.BlockSpec((tile_m, P_pad), lambda i, sw: (i, 0))),
        compiler_params=_compiler_params(needed),
    )(soft_w, encoded_layers, proj_wt, proj_b)
    return out[:N, :P]


if __name__ == "__main__":
    key = jax.random.PRNGKey(0)
    # bert-base: 12 hidden layers + embedding layer -> num_layers = 13
    num_layers = 13
    B, L, H, P = 2, 16, 128, 128          # small synthetic hidden size / proj dim

    k1, k2, k3 = jax.random.split(key, 3)
    # Synthetic stand-in for the (frozen) transformer's per-layer hidden states.
    encoded_layers = jax.random.normal(k1, (num_layers, B, L, H), jnp.float32)
    # Module init: self.weighing_params = nn.Parameter(torch.ones(num_layers))
    weighing_params = jnp.ones((num_layers,), jnp.float32)
    # use_proj=True: nn.Linear(hidden_size, proj_dim) -> weight (P, H), bias (P,)
    proj_w = jax.random.normal(k2, (P, H), jnp.float32) * 0.02
    proj_b = jax.random.normal(k3, (P,), jnp.float32) * 0.01

    layers_flat = encoded_layers.reshape(num_layers, B * L, H)

    # Pure-JAX reference mirroring the PyTorch loop (just_last_layer=False).
    sw = jax.nn.softmax(weighing_params)
    mixed_ref = sum(sw[i] * encoded_layers[i] for i in range(num_layers))

    # --- use_proj=False path (module default), tight tolerance ----------------
    out_noproj = encoder_forward(layers_flat, weighing_params)
    jax.block_until_ready(out_noproj)
    assert jnp.allclose(out_noproj.reshape(B, L, H), mixed_ref,
                        atol=1e-5, rtol=1e-5), "mismatch (no proj)"

    # --- use_proj=True, f32 MXU path (precision=HIGHEST), tight tolerance -----
    ref_f32 = jnp.einsum("bth,ph->btp", mixed_ref, proj_w,
                         precision=jax.lax.Precision.HIGHEST) + proj_b
    out_f32 = encoder_forward(layers_flat, weighing_params, proj_w.T, proj_b,
                              proj_compute_dtype=jnp.float32).reshape(B, L, P)
    jax.block_until_ready(out_f32)
    assert jnp.allclose(out_f32, ref_f32, atol=1e-4, rtol=1e-4), "mismatch (proj f32)"

    # --- use_proj=True, default bf16 MXU path (documented precision tradeoff) -
    out_bf = encoder_forward(layers_flat, weighing_params,
                             proj_w.T, proj_b).reshape(B, L, P)
    jax.block_until_ready(out_bf)
    assert jnp.allclose(out_bf, ref_f32, atol=1e-2, rtol=1e-2), "mismatch (proj bf16)"

    # --- bf16 hidden states end-to-end (no upcast in the wrapper) -------------
    layers_bf16 = layers_flat.astype(jnp.bfloat16)
    out_bf16_in = encoder_forward(layers_bf16, weighing_params)
    jax.block_until_ready(out_bf16_in)
    ref_bf16_in = sum(sw[i] * layers_bf16[i].astype(jnp.float32)
                      for i in range(num_layers))
    assert jnp.allclose(out_bf16_in.astype(jnp.float32), ref_bf16_in,
                        atol=2e-2, rtol=2e-2), "mismatch (bf16 input)"

    # --- ragged N (B*L not tile-aligned) + proj_dim not a multiple of 128 -----
    L2, P2 = 9, 64
    enc2 = jax.random.normal(k1, (num_layers, B, L2, H), jnp.float32)
    pw2 = jax.random.normal(k2, (P2, H), jnp.float32) * 0.02
    pb2 = jax.random.normal(k3, (P2,), jnp.float32) * 0.01
    out2 = encoder_forward(enc2.reshape(num_layers, B * L2, H), weighing_params,
                           pw2.T, pb2,
                           proj_compute_dtype=jnp.float32).reshape(B, L2, P2)
    jax.block_until_ready(out2)
    mixed2 = sum(sw[i] * enc2[i] for i in range(num_layers))
    ref2 = jnp.einsum("bth,ph->btp", mixed2, pw2,
                      precision=jax.lax.Precision.HIGHEST) + pb2
    assert jnp.allclose(out2, ref2, atol=1e-4, rtol=1e-4), "mismatch (ragged)"

    print("KERNEL_OK")
</pallas_src>

<mosaic_0001>
module attributes {stable_mosaic.version = 11 : i64} {
  func.func @_mix_kernel(%arg0: i32, %arg1: memref<13xf32, #tpu.memory_space<smem>>, %arg2: memref<13x16x128xf32, #tpu.memory_space<vmem>>, %arg3: memref<16x128xf32, #tpu.memory_space<vmem>>) attributes {dimension_semantics = [#tpu.dimension_semantics<parallel>], iteration_bounds = array<i64: 2>, scalar_prefetch = 1 : i64, scratch_operands = 0 : i64, tpu.core_type = #tpu.core_type<tc>, window_params = [{transform_indices = @transform_0, window_bounds = array<i64: 13, 16, 128>}, {transform_indices = @transform_1, window_bounds = array<i64: 16, 128>}]} {
    %c0 = arith.constant 0 : index
    %c0_0 = arith.constant 0 : index
    %c0_1 = arith.constant 0 : index
    %0 = vector.load %arg2[%c0, %c0_0, %c0_1] : memref<13x16x128xf32, #tpu.memory_space<vmem>>, vector<1x16x128xf32>
    %1 = vector.shape_cast %0 : vector<1x16x128xf32> to vector<16x128xf32>
    %c0_2 = arith.constant 0 : index
    %2 = memref.load %arg1[%c0_2] : memref<13xf32, #tpu.memory_space<smem>>
    %3 = vector.broadcast %2 : f32 to vector<16x128xf32>
    %4 = arith.mulf %1, %3 : vector<16x128xf32>
    %c1 = arith.constant 1 : index
    %c0_3 = arith.constant 0 : index
    %c0_4 = arith.constant 0 : index
    %5 = vector.load %arg2[%c1, %c0_3, %c0_4] : memref<13x16x128xf32, #tpu.memory_space<vmem>>, vector<1x16x128xf32>
    %6 = vector.shape_cast %5 : vector<1x16x128xf32> to vector<16x128xf32>
    %c1_5 = arith.constant 1 : index
    %7 = memref.load %arg1[%c1_5] : memref<13xf32, #tpu.memory_space<smem>>
    %8 = vector.broadcast %7 : f32 to vector<16x128xf32>
    %9 = arith.mulf %6, %8 : vector<16x128xf32>
    %10 = arith.addf %4, %9 : vector<16x128xf32>
    %c2 = arith.constant 2 : index
    %c0_6 = arith.constant 0 : index
    %c0_7 = arith.constant 0 : index
    %11 = vector.load %arg2[%c2, %c0_6, %c0_7] : memref<13x16x128xf32, #tpu.memory_space<vmem>>, vector<1x16x128xf32>
    %12 = vector.shape_cast %11 : vector<1x16x128xf32> to vector<16x128xf32>
    %c2_8 = arith.constant 2 : index
    %13 = memref.load %arg1[%c2_8] : memref<13xf32, #tpu.memory_space<smem>>
    %14 = vector.broadcast %13 : f32 to vector<16x128xf32>
    %15 = arith.mulf %12, %14 : vector<16x128xf32>
    %16 = arith.addf %10, %15 : vector<16x128xf32>
    %c3 = arith.constant 3 : index
    %c0_9 = arith.constant 0 : index
    %c0_10 = arith.constant 0 : index
    %17 = vector.load %arg2[%c3, %c0_9, %c0_10] : memref<13x16x128xf32, #tpu.memory_space<vmem>>, vector<1x16x128xf32>
    %18 = vector.shape_cast %17 : vector<1x16x128xf32> to vector<16x128xf32>
    %c3_11 = arith.constant 3 : index
    %19 = memref.load %arg1[%c3_11] : memref<13xf32, #tpu.memory_space<smem>>
    %20 = vector.broadcast %19 : f32 to vector<16x128xf32>
    %21 = arith.mulf %18, %20 : vector<16x128xf32>
    %22 = arith.addf %16, %21 : vector<16x128xf32>
    %c4 = arith.constant 4 : index
    %c0_12 = arith.constant 0 : index
    %c0_13 = arith.constant 0 : index
    %23 = vector.load %arg2[%c4, %c0_12, %c0_13] : memref<13x16x128xf32, #tpu.memory_space<vmem>>, vector<1x16x128xf32>
    %24 = vector.shape_cast %23 : vector<1x16x128xf32> to vector<16x128xf32>
    %c4_14 = arith.constant 4 : index
    %25 = memref.load %arg1[%c4_14] : memref<13xf32, #tpu.memory_space<smem>>
    %26 = vector.broadcast %25 : f32 to vector<16x128xf32>
    %27 = arith.mulf %24, %26 : vector<16x128xf32>
    %28 = arith.addf %22, %27 : vector<16x128xf32>
    %c5 = arith.constant 5 : index
    %c0_15 = arith.constant 0 : index
    %c0_16 = arith.constant 0 : index
    %29 = vector.load %arg2[%c5, %c0_15, %c0_16] : memref<13x16x128xf32, #tpu.memory_space<vmem>>, vector<1x16x128xf32>
    %30 = vector.shape_cast %29 : vector<1x16x128xf32> to vector<16x128xf32>
    %c5_17 = arith.constant 5 : index
    %31 = memref.load %arg1[%c5_17] : memref<13xf32, #tpu.memory_space<smem>>
    %32 = vector.broadcast %31 : f32 to vector<16x128xf32>
    %33 = arith.mulf %30, %32 : vector<16x128xf32>
    %34 = arith.addf %28, %33 : vector<16x128xf32>
    %c6 = arith.constant 6 : index
    %c0_18 = arith.constant 0 : index
    %c0_19 = arith.constant 0 : index
    %35 = vector.load %arg2[%c6, %c0_18, %c0_19] : memref<13x16x128xf32, #tpu.memory_space<vmem>>, vector<1x16x128xf32>
    %36 = vector.shape_cast %35 : vector<1x16x128xf32> to vector<16x128xf32>
    %c6_20 = arith.constant 6 : index
    %37 = memref.load %arg1[%c6_20] : memref<13xf32, #tpu.memory_space<smem>>
    %38 = vector.broadcast %37 : f32 to vector<16x128xf32>
    %39 = arith.mulf %36, %38 : vector<16x128xf32>
    %40 = arith.addf %34, %39 : vector<16x128xf32>
    %c7 = arith.constant 7 : index
    %c0_21 = arith.constant 0 : index
    %c0_22 = arith.constant 0 : index
    %41 = vector.load %arg2[%c7, %c0_21, %c0_22] : memref<13x16x128xf32, #tpu.memory_space<vmem>>, vector<1x16x128xf32>
    %42 = vector.shape_cast %41 : vector<1x16x128xf32> to vector<16x128xf32>
    %c7_23 = arith.constant 7 : index
    %43 = memref.load %arg1[%c7_23] : memref<13xf32, #tpu.memory_space<smem>>
    %44 = vector.broadcast %43 : f32 to vector<16x128xf32>
    %45 = arith.mulf %42, %44 : vector<16x128xf32>
    %46 = arith.addf %40, %45 : vector<16x128xf32>
    %c8 = arith.constant 8 : index
    %c0_24 = arith.constant 0 : index
    %c0_25 = arith.constant 0 : index
    %47 = vector.load %arg2[%c8, %c0_24, %c0_25] : memref<13x16x128xf32, #tpu.memory_space<vmem>>, vector<1x16x128xf32>
    %48 = vector.shape_cast %47 : vector<1x16x128xf32> to vector<16x128xf32>
    %c8_26 = arith.constant 8 : index
    %49 = memref.load %arg1[%c8_26] : memref<13xf32, #tpu.memory_space<smem>>
    %50 = vector.broadcast %49 : f32 to vector<16x128xf32>
    %51 = arith.mulf %48, %50 : vector<16x128xf32>
    %52 = arith.addf %46, %51 : vector<16x128xf32>
    %c9 = arith.constant 9 : index
    %c0_27 = arith.constant 0 : index
    %c0_28 = arith.constant 0 : index
    %53 = vector.load %arg2[%c9, %c0_27, %c0_28] : memref<13x16x128xf32, #tpu.memory_space<vmem>>, vector<1x16x128xf32>
    %54 = vector.shape_cast %53 : vector<1x16x128xf32> to vector<16x128xf32>
    %c9_29 = arith.constant 9 : index
    %55 = memref.load %arg1[%c9_29] : memref<13xf32, #tpu.memory_space<smem>>
    %56 = vector.broadcast %55 : f32 to vector<16x128xf32>
    %57 = arith.mulf %54, %56 : vector<16x128xf32>
    %58 = arith.addf %52, %57 : vector<16x128xf32>
    %c10 = arith.constant 10 : index
    %c0_30 = arith.constant 0 : index
    %c0_31 = arith.constant 0 : index
    %59 = vector.load %arg2[%c10, %c0_30, %c0_31] : memref<13x16x128xf32, #tpu.memory_space<vmem>>, vector<1x16x128xf32>
    %60 = vector.shape_cast %59 : vector<1x16x128xf32> to vector<16x128xf32>
    %c10_32 = arith.constant 10 : index
    %61 = memref.load %arg1[%c10_32] : memref<13xf32, #tpu.memory_space<smem>>
    %62 = vector.broadcast %61 : f32 to vector<16x128xf32>
    %63 = arith.mulf %60, %62 : vector<16x128xf32>
    %64 = arith.addf %58, %63 : vector<16x128xf32>
    %c11 = arith.constant 11 : index
    %c0_33 = arith.constant 0 : index
    %c0_34 = arith.constant 0 : index
    %65 = vector.load %arg2[%c11, %c0_33, %c0_34] : memref<13x16x128xf32, #tpu.memory_space<vmem>>, vector<1x16x128xf32>
    %66 = vector.shape_cast %65 : vector<1x16x128xf32> to vector<16x128xf32>
    %c11_35 = arith.constant 11 : index
    %67 = memref.load %arg1[%c11_35] : memref<13xf32, #tpu.memory_space<smem>>
    %68 = vector.broadcast %67 : f32 to vector<16x128xf32>
    %69 = arith.mulf %66, %68 : vector<16x128xf32>
    %70 = arith.addf %64, %69 : vector<16x128xf32>
    %c12 = arith.constant 12 : index
    %c0_36 = arith.constant 0 : index
    %c0_37 = arith.constant 0 : index
    %71 = vector.load %arg2[%c12, %c0_36, %c0_37] : memref<13x16x128xf32, #tpu.memory_space<vmem>>, vector<1x16x128xf32>
    %72 = vector.shape_cast %71 : vector<1x16x128xf32> to vector<16x128xf32>
    %c12_38 = arith.constant 12 : index
    %73 = memref.load %arg1[%c12_38] : memref<13xf32, #tpu.memory_space<smem>>
    %74 = vector.broadcast %73 : f32 to vector<16x128xf32>
    %75 = arith.mulf %72, %74 : vector<16x128xf32>
    %76 = arith.addf %70, %75 : vector<16x128xf32>
    %c0_39 = arith.constant 0 : index
    %c0_40 = arith.constant 0 : index
    %77 = vector.load %arg3[%c0_39, %c0_40] : memref<16x128xf32, #tpu.memory_space<vmem>>, vector<16x128xf32>
    tpu.vector_store %arg3[%c0_39, %c0_40], %76 {strides = array<i32>} : memref<16x128xf32, #tpu.memory_space<vmem>>, vector<16x128xf32>,
    return
  }
  func.func @transform_0(%arg0: i32, %arg1: memref<13xf32, #tpu.memory_space<smem>>) -> (i32, i32, i32) {
    %c0_i32 = arith.constant 0 : i32
    %c0_i32_0 = arith.constant 0 : i32
    %c0_i32_1 = arith.constant 0 : i32
    return %c0_i32, %arg0, %c0_i32_0 : i32, i32, i32
  }
  func.func @transform_1(%arg0: i32, %arg1: memref<13xf32, #tpu.memory_space<smem>>) -> (i32, i32) {
    %c0_i32 = arith.constant 0 : i32
    %c0_i32_0 = arith.constant 0 : i32
    return %arg0, %c0_i32 : i32, i32
  }
}

</mosaic_0001>

<llo_original>
// kernel: tpu_custom_call.1
$region0: #{tpu_custom_call.1}
  #allocation0 [shape = 'u32[]', space=smem, size = 0x4, offset = 0x4, fixed_abs, tag = 'smem constant byte address 0x4 - core index']
  #allocation1 [shape = 'u32[144,128]{1,0:T(1,128)}', space=vmem, size = 0x12000, scoped, tag = 'internal scratch']
  #allocation2 [shape = 's32[1]{0}', space=sflag, size = 0x4, scoped, tag = 'scoped memory for tpu_custom_call.1']
  #allocation3 [shape = 'u8[512]{0}', space=smem, size = 0x200, scoped, tag = 'prefetched SMEM operand 0']
  #allocation8 [shape = 's32[]', space=sflag, size = 0x4, offset = 0, fixed_abs, tag = 'sflag constant byte address 0x0 - dummy sync flag']
  %s0 = inlined_call_operand.hbm [shape: f32[13], index: 0, kind: input, shape index: {}]
  %s1 = inlined_call_operand.hbm [shape: f32[13,32,128], index: 1, kind: input, shape index: {}]
  %s2 = inlined_call_operand.hbm [shape: f32[32,128], index: 2, kind: output, shape index: {}]
  %s3 = sld [smem:[#allocation0]]
  $region41: #{tpu_custom_call.1} parent=0
    _
  %s5 = ssub.s32 1, %s3
  %s6 = scalar_select 0, %s5, %s3
  %8 = dma.hbm_to_smem %s0, 16, [#allocation3], [#allocation2]
  %9 = dma.done [#allocation2], 16
  %10 = sfence
  $region1: #{tpu_custom_call.1} parent=0
    #allocation4 [shape = 'u8[212992]{0}', space=vmem, size = 0x34000, scoped, tag = 'input window, operand 1']
    #allocation5 [shape = 's32[2]{0}', space=sflag, size = 0x8, scoped, tag = 'scoped memory for tpu_custom_call.1']
    #allocation6 [shape = 's32[2]{0}', space=sflag, size = 0x8, scoped, tag = 'scoped memory for tpu_custom_call.1']
    #allocation7 [shape = 'u8[16384]{0}', space=vmem, size = 0x4000, scoped, tag = 'output window, operand 0']
    %11 = vsyncpa [#allocation5], 0
    %s12 = scalar_lea.sflag [#allocation5], 1
    %13 = vsyncpa %s12, 0
    %14 = vsyncpa [#allocation6], 0
    %s15 = scalar_lea.sflag [#allocation6], 1
    %16 = vsyncpa %s15, 0
    loop: start=0, step=1, limit=4
    $region2: #{tpu_custom_call.1} parent=1 // loop_pre_header
      _
    $region3: #{tpu_custom_call.1} parent=1 // loop_header
      %s18 = sphi 0, %s22
      %p19 = scmp.ge.s32.totalorder %s18, 4
      %s28 = sphi 0, %s30
      %s31 = sphi 0, %s28
      %s32 = sphi 0, %s31
      %s48 = sphi 0, %s32
      %s54 = sphi 0, %s56
      %s57 = sphi 0, %s54
      %s58 = sphi 0, %s57
      %s74 = sphi 0, %s58
    $region4: #{tpu_custom_call.1} parent=1 // loop_header_branch
      %21 = sbr.rel (%p19) target = $region8
    $region5: #{tpu_custom_call.1} parent=1 // loop_body
      %s23 = ssub.s32 %s18, 1
      %s24 = ssub.s32 %s18, 2
      %s25 = sadd.s32 %s18, 1
      %s26 = ssub.s32 %s18, %s25
      %p27 = scmp.eq.s32.totalorder %s26, 0
      %s29 = sadd.s32 %s28, 1
      %s30 = scalar_select %p27, %s28, %s29
      %p33 = pneg %p27
      %p34 = scmp.eq.s32.totalorder %s18, 1
      %p35 = por %p33, %p34
      %p36 = scmp.ne.s32.totalorder %s28, %s31
      %p37 = scmp.eq.s32.totalorder %s18, 0
      %p38 = por %p36, %p37
      %p39 = scmp.ne.s32.totalorder %s28, %s31
      %p40 = scmp.eq.s32.totalorder %s23, 1
      %p41 = por %p39, %p40
      %p42 = scmp.ne.s32.totalorder %s31, %s32
      %p43 = scmp.eq.s32.totalorder %s23, 0
      %p44 = por %p42, %p43
      %p45 = scmp.ne.s32.totalorder %s31, %s32
      %p46 = scmp.eq.s32.totalorder %s24, 1
      %p47 = por %p45, %p46
      %p49 = scmp.ne.s32.totalorder %s32, %s48
      %p50 = scmp.eq.s32.totalorder %s24, 0
      %p51 = por %p49, %p50
      %s52 = ssub.s32 %s18, %s25
      %p53 = scmp.eq.s32.totalorder %s52, 0
      %s55 = sadd.s32 %s54, 1
      %s56 = scalar_select %p53, %s54, %s55
      %p59 = pneg %p53
      %p60 = scmp.eq.s32.totalorder %s18, 1
      %p61 = por %p59, %p60
      %p62 = scmp.ne.s32.totalorder %s54, %s57
      %p63 = scmp.eq.s32.totalorder %s18, 0
      %p64 = por %p62, %p63
      %p65 = scmp.ne.s32.totalorder %s54, %s57
      %p66 = scmp.eq.s32.totalorder %s23, 1
      %p67 = por %p65, %p66
      %p68 = scmp.ne.s32.totalorder %s57, %s58
      %p69 = scmp.eq.s32.totalorder %s23, 0
      %p70 = por %p68, %p69
      %p71 = scmp.ne.s32.totalorder %s57, %s58
      %p72 = scmp.eq.s32.totalorder %s24, 1
      %p73 = por %p71, %p72
      %p75 = scmp.ne.s32.totalorder %s58, %s74
      %p76 = scmp.eq.s32.totalorder %s24, 0
      %p77 = por %p75, %p76
      %p78 = scmp.le.s32.totalorder 1, %s18
      %p79 = scmp.lt.s32.totalorder %s18, 3
      %p80 = pnand %p78, %p79
      %p81 = pneg %p80
      // Predicated region
      $region9: #{tpu_custom_call.1} parent=5 // pred_check
        _
      $region10: #{tpu_custom_call.1} parent=5 // pred_check_branch
        %83 = sbr.rel (%p80) target = $region12
      $region11: #{tpu_custom_call.1} parent=5 // pred_region
        %s84 = ssub.s32 %s18, 1
      $region12: #{tpu_custom_call.1} parent=5 // pred_fallthru
        _
      %p85 = scmp.lt.s32.totalorder %s18, 2
      // Predicated region
      $region13: #{tpu_custom_call.1} parent=5 // pred_check
        %p86 = pneg %p85
      $region14: #{tpu_custom_call.1} parent=5 // pred_check_branch
        %88 = sbr.rel (%p86) target = $region16
      $region15: #{tpu_custom_call.1} parent=5 // pred_region
        // Predicated region
        $region17: #{tpu_custom_call.1} parent=15 // pred_check
          %p89 = pneg %p38
        $region18: #{tpu_custom_call.1} parent=15 // pred_check_branch
          %91 = sbr.rel (%p89) target = $region20
        $region19: #{tpu_custom_call.1} parent=15 // pred_region
          #allocation9 [shape = 'u32[6]{0}', space=smem, size = 0x18, scoped, tag = 'DMA stride descriptor']
          %s92 = sand.u32 %s28, 1
          %s93 = scalar_lea.sflag [#allocation5], %s92
          %s94 = sand.u32 %s28, 1
          %s95 = smul.addr %s94, 208
          %s96 = scalar_lea.vmem [#allocation4], %s95
          %s97 = smul.u32 2, %s18
          %s99 = ssub.s32 3328, 3328
          %100 = vsyncadd %s93, %s99
          %s101 = smul.addr %s97, 128
          %s102 = scalar_lea.hbm %s1, %s101
          %s104 = sshll.u32 1, 14
          %s105 = sxor.u32 4294967295, %s104
          %s107 = sld [smem:[#allocation0]]
          %s108 = sadd.s32 2, %s107
          %s110 = sshll.u32 7, 26
          %s111 = sxor.u32 4294967295, %s110
          %s112 = sand.u32 0, %s111
          %s113 = sshll.u32 %s108, 26
          %s114 = sor.u32 %s112, %s113
          %s115 = sshll.u32 %s96, 4
          %s116 = int_to_ptr.vmem [resolvable:$true] %s115
          %122 = sst [smem:[#allocation9]] 512
          %s123 = scalar_lea.smem [#allocation9], 1
          %124 = sst [smem:[%s123]] 256
          %s125 = scalar_lea.smem [#allocation9], 2
          %126 = sst [smem:[%s125]] 2
          %s127 = scalar_lea.smem [#allocation9], 3
          %128 = sst [smem:[%s127]] 128
          %s129 = scalar_lea.smem [#allocation9], 4
          %130 = sst [smem:[%s129]] 128
          %s131 = scalar_lea.smem [#allocation9], 5
          %132 = sst [smem:[%s131]] 8
          %134 = dma.general %s102, 3328, %s116, %s93, [#allocation8], [#allocation9], %s114, 0
        $region20: #{tpu_custom_call.1} parent=15 // pred_fallthru
          _
      $region16: #{tpu_custom_call.1} parent=5 // pred_fallthru
        _
      %p135 = scmp.le.s32.totalorder 1, %s18
      %p136 = scmp.lt.s32.totalorder %s18, 3
      %p137 = pnand %p135, %p136
      %p138 = pneg %p137
      // Predicated region
      $region21: #{tpu_custom_call.1} parent=5 // pred_check
        _
      $region22: #{tpu_custom_call.1} parent=5 // pred_check_branch
        %140 = sbr.rel (%p137) target = $region24
      $region23: #{tpu_custom_call.1} parent=5 // pred_region
        %s141 = ssub.s32 %s18, 1
        %s142 = sand.u32 %s31, 1
        %s143 = scalar_lea.sflag [#allocation5], %s142
        %s144 = sand.u32 %s31, 1
        %s145 = smul.addr %s144, 208
        %s146 = scalar_lea.vmem [#allocation4], %s145
        // Predicated region
        $region25: #{tpu_custom_call.1} parent=23 // pred_check
          %p147 = pneg %p44
        $region26: #{tpu_custom_call.1} parent=23 // pred_check_branch
          %149 = sbr.rel (%p147) target = $region28
        $region27: #{tpu_custom_call.1} parent=23 // pred_region
          %150 = dma.done %s143, 3328
        $region28: #{tpu_custom_call.1} parent=23 // pred_fallthru
          _
        %s151 = sand.u32 %s31, 1
        %s152 = scalar_lea.sflag [#allocation5], %s151
        %s153 = sand.u32 %s31, 1
        %s154 = smul.addr %s153, 208
        %s155 = scalar_lea.vmem [#allocation4], %s154
        %p156 = pneg %p44
        %p157 = pneg %p41
        %p158 = pneg %p70
        %p159 = pneg %p67
        %s160 = sand.u32 %s57, 1
        %s161 = scalar_lea.sflag [#allocation6], %s160
        %s162 = sand.u32 %s57, 1
        %s163 = smul.addr %s162, 16
        %s164 = scalar_lea.vmem [#allocation7], %s163
        %s165 = smul.u32 2, %s23
        %s166 = smul.u32 2, %s23
        %v167 = vld [vmem:[%s146] sm:$0xff]
        %v168 = vld [vmem:[%s146 + $0x8] sm:$0xff]
        %s169 = sld [smem:[#allocation3]]
        %v170 = vstv %s169
        %v171 = vmul.f32 %v167, %v170
        %v172 = vmul.f32 %v168, %v170
        %s173 = scalar_lea.vmem %s146, 16 [#allocation4]
        %v174 = vld [vmem:[%s173] sm:$0xff]
        %v175 = vld [vmem:[%s173 + $0x8] sm:$0xff]
        %s176 = sld [smem:[#allocation3 + $0x1]]
        %v177 = vstv %s176
        %v178 = vmul.f32 %v174, %v177
        %v179 = vmul.f32 %v175, %v177
        %v180 = vadd.f32 %v171, %v178
        %v181 = vadd.f32 %v172, %v179
        %s182 = scalar_lea.vmem %s146, 32 [#allocation4]
        %v183 = vld [vmem:[%s182] sm:$0xff]
        %v184 = vld [vmem:[%s182 + $0x8] sm:$0xff]
        %s185 = sld [smem:[#allocation3 + $0x2]]
        %v186 = vstv %s185
        %v187 = vmul.f32 %v183, %v186
        %v188 = vmul.f32 %v184, %v186
        %v189 = vadd.f32 %v180, %v187
        %v190 = vadd.f32 %v181, %v188
        %s191 = scalar_lea.vmem %s146, 48 [#allocation4]
        %v192 = vld [vmem:[%s191] sm:$0xff]
        %v193 = vld [vmem:[%s191 + $0x8] sm:$0xff]
        %s194 = sld [smem:[#allocation3 + $0x3]]
        %v195 = vstv %s194
        %v196 = vmul.f32 %v192, %v195
        %v197 = vmul.f32 %v193, %v195
        %v198 = vadd.f32 %v189, %v196
        %v199 = vadd.f32 %v190, %v197
        %s200 = scalar_lea.vmem %s146, 64 [#allocation4]
        %v201 = vld [vmem:[%s200] sm:$0xff]
        %v202 = vld [vmem:[%s200 + $0x8] sm:$0xff]
        %s203 = sld [smem:[#allocation3 + $0x4]]
        %v204 = vstv %s203
        %v205 = vmul.f32 %v201, %v204
        %v206 = vmul.f32 %v202, %v204
        %v207 = vadd.f32 %v198, %v205
        %v208 = vadd.f32 %v199, %v206
        %s209 = scalar_lea.vmem %s146, 80 [#allocation4]
        %v210 = vld [vmem:[%s209] sm:$0xff]
        %v211 = vld [vmem:[%s209 + $0x8] sm:$0xff]
        %s212 = sld [smem:[#allocation3 + $0x5]]
        %v213 = vstv %s212
        %v214 = vmul.f32 %v210, %v213
        %v215 = vmul.f32 %v211, %v213
        %v216 = vadd.f32 %v207, %v214
        %v217 = vadd.f32 %v208, %v215
        %s218 = scalar_lea.vmem %s146, 96 [#allocation4]
        %v219 = vld [vmem:[%s218] sm:$0xff]
        %v220 = vld [vmem:[%s218 + $0x8] sm:$0xff]
        %s221 = sld [smem:[#allocation3 + $0x6]]
        %v222 = vstv %s221
        %v223 = vmul.f32 %v219, %v222
        %v224 = vmul.f32 %v220, %v222
        %v225 = vadd.f32 %v216, %v223
        %v226 = vadd.f32 %v217, %v224
        %s227 = scalar_lea.vmem %s146, 112 [#allocation4]
        %v228 = vld [vmem:[%s227] sm:$0xff]
        %v229 = vld [vmem:[%s227 + $0x8] sm:$0xff]
        %s230 = sld [smem:[#allocation3 + $0x7]]
        %v231 = vstv %s230
        %v232 = vmul.f32 %v228, %v231
        %v233 = vmul.f32 %v229, %v231
        %v234 = vadd.f32 %v225, %v232
        %v235 = vadd.f32 %v226, %v233
        %s236 = scalar_lea.vmem %s146, 128 [#allocation4]
        %v237 = vld [vmem:[%s236] sm:$0xff]
        %v238 = vld [vmem:[%s236 + $0x8] sm:$0xff]
        %s239 = sld [smem:[#allocation3 + $0x8]]
        %v240 = vstv %s239
        %v241 = vmul.f32 %v237, %v240
        %v242 = vmul.f32 %v238, %v240
        %v243 = vadd.f32 %v234, %v241
        %v244 = vadd.f32 %v235, %v242
        %s245 = scalar_lea.vmem %s146, 144 [#allocation4]
        %v246 = vld [vmem:[%s245] sm:$0xff]
        %v247 = vld [vmem:[%s245 + $0x8] sm:$0xff]
        %s248 = sld [smem:[#allocation3 + $0x9]]
        %v249 = vstv %s248
        %v250 = vmul.f32 %v246, %v249
        %v251 = vmul.f32 %v247, %v249
        %v252 = vadd.f32 %v243, %v250
        %v253 = vadd.f32 %v244, %v251
        %s254 = scalar_lea.vmem %s146, 160 [#allocation4]
        %v255 = vld [vmem:[%s254] sm:$0xff]
        %v256 = vld [vmem:[%s254 + $0x8] sm:$0xff]
        %s257 = sld [smem:[#allocation3 + $0xa]]
        %v258 = vstv %s257
        %v259 = vmul.f32 %v255, %v258
        %v260 = vmul.f32 %v256, %v258
        %v261 = vadd.f32 %v252, %v259
        %v262 = vadd.f32 %v253, %v260
        %s263 = scalar_lea.vmem %s146, 176 [#allocation4]
        %v264 = vld [vmem:[%s263] sm:$0xff]
        %v265 = vld [vmem:[%s263 + $0x8] sm:$0xff]
        %s266 = sld [smem:[#allocation3 + $0xb]]
        %v267 = vstv %s266
        %v268 = vmul.f32 %v264, %v267
        %v269 = vmul.f32 %v265, %v267
        %v270 = vadd.f32 %v261, %v268
        %v271 = vadd.f32 %v262, %v269
        %s272 = scalar_lea.vmem %s146, 192 [#allocation4]
        %v273 = vld [vmem:[%s272] sm:$0xff]
        %v274 = vld [vmem:[%s272 + $0x8] sm:$0xff]
        %s275 = sld [smem:[#allocation3 + $0xc]]
        %v276 = vstv %s275
        %v277 = vmul.f32 %v273, %v276
        %v278 = vmul.f32 %v274, %v276
        %v279 = vadd.f32 %v270, %v277
        %v280 = vadd.f32 %v271, %v278
        %281 = vst [vmem:[%s164] sm:$0xff] %v279
        %282 = vst [vmem:[%s164 + $0x8] sm:$0xff] %v280
        %s283 = sand.u32 %s57, 1
        %s284 = scalar_lea.sflag [#allocation6], %s283
        %s285 = sand.u32 %s57, 1
        %s286 = smul.addr %s285, 16
        %s287 = scalar_lea.vmem [#allocation7], %s286
        // Predicated region
        $region29: #{tpu_custom_call.1} parent=23 // pred_check
          %p288 = pneg %p67
        $region30: #{tpu_custom_call.1} parent=23 // pred_check_branch
          %290 = sbr.rel (%p288) target = $region32
        $region31: #{tpu_custom_call.1} parent=23 // pred_region
          %s291 = smul.u32 2, %s23
          %s293 = ssub.s32 256, 256
          %294 = vsyncadd %s284, %s293
          %s295 = smul.addr %s291, 128
          %s296 = scalar_lea.hbm %s2, %s295
          %s297 = sshll.u32 %s287, 4
          %s298 = int_to_ptr.vmem [resolvable:$true] %s297
          %303 = dma.vmem_to_hbm [thread:$0]  %s298, 256, %s296, %s284, 128, 128, 8
        $region32: #{tpu_custom_call.1} parent=23 // pred_fallthru
          _
      $region24: #{tpu_custom_call.1} parent=5 // pred_fallthru
        _
      %p304 = scmp.le.s32.totalorder 2, %s18
      // Predicated region
      $region33: #{tpu_custom_call.1} parent=5 // pred_check
        %p305 = pneg %p304
      $region34: #{tpu_custom_call.1} parent=5 // pred_check_branch
        %307 = sbr.rel (%p305) target = $region36
      $region35: #{tpu_custom_call.1} parent=5 // pred_region
        %s308 = ssub.s32 %s18, 2
        // Predicated region
        $region37: #{tpu_custom_call.1} parent=35 // pred_check
          %p309 = pneg %p73
        $region38: #{tpu_custom_call.1} parent=35 // pred_check_branch
          %311 = sbr.rel (%p309) target = $region40
        $region39: #{tpu_custom_call.1} parent=35 // pred_region
          %s312 = sand.u32 %s58, 1
          %s313 = scalar_lea.sflag [#allocation6], %s312
          %s314 = sand.u32 %s58, 1
          %s315 = smul.addr %s314, 16
          %s316 = scalar_lea.vmem [#allocation7], %s315
          %317 = dma.done %s313, 256
        $region40: #{tpu_custom_call.1} parent=35 // pred_fallthru
          _
      $region36: #{tpu_custom_call.1} parent=5 // pred_fallthru
        _
    $region6: #{tpu_custom_call.1} parent=1 // loop_footer
      %s22 = sadd.s32 1, %s18
    $region7: #{tpu_custom_call.1} parent=1 // loop_footer_branch
      %17 = sbr.rel target = $region3
    $region8: #{tpu_custom_call.1} parent=1 // loop_exit
      _
    %318 = vsyncpa [#allocation5], 1
    %s319 = scalar_lea.sflag [#allocation5], 1
    %320 = vsyncpa %s319, 1
    %321 = vsyncpa [#allocation6], 1
    %s322 = scalar_lea.sflag [#allocation6], 1
    %323 = vsyncpa %s322, 1

</llo_original>
